<compile_context>
chip_gen: v7x
topology: tpu7x:2x2x1
jax: 0.10.0
libtpu: 0.0.40
codegen_flags: <defaults>
</compile_context>

<pallas_src>
import functools
import math

import jax
import jax.numpy as jnp
from jax.experimental import pallas as pl
from jax.experimental.pallas import tpu as pltpu

EMBED_DIM = 768          # hardcoded in EncoderModel.__init__
NUM_HEADS = 2            # default num_heads
NUM_LAYERS = 2           # default num_layers
DIM_FEEDFORWARD = 2048   # torch.nn.TransformerEncoderLayer default


def _round_up(x, m):
    return ((x + m - 1) // m) * m


def _vmem_capacity_bytes():
    """Physical VMEM per TensorCore (v5e/v6e: 128 MiB, v7x: 64 MiB)."""
    try:
        info = pltpu.get_tpu_info()
        for attr in ("vmem_capacity_bytes", "vmem_bytes", "vmem_size_bytes"):
            v = getattr(info, attr, None)
            if v:
                return int(v)
    except Exception:
        pass
    return 64 * 1024 * 1024      # conservative (v7x floor)


# ---------------------------------------------------------------------------
# Eval branch: compute_similarity  (q @ p.T)
# ---------------------------------------------------------------------------

def similarity_kernel(q_ref, p_ref, o_ref):
    # q block: (TM, D) bf16, p block: (TN, D) bf16.  NT matmul on the MXU
    # (contract on dim 1 of both) -> no host-side transpose pass over p_reps.
    o_ref[...] = jax.lax.dot_general(
        q_ref[...], p_ref[...],
        dimension_numbers=(((1,), (1,)), ((), ())),
        preferred_element_type=jnp.float32).astype(o_ref.dtype)


def compute_similarity(q_reps, p_reps, *, tm=512, tn=512):
    """scores = q_reps @ p_reps.T  (bf16 operands, f32 accumulation)."""
    M, D = q_reps.shape
    N = p_reps.shape[0]
    tm = min(tm, _round_up(M, 8))
    tn = min(tn, _round_up(N, 128))
    Mp = _round_up(M, tm)
    Np = _round_up(N, tn)

    q = q_reps.astype(jnp.bfloat16)
    p = p_reps.astype(jnp.bfloat16)             # (N, D): streamed untransposed
    if Mp != M:
        q = jnp.pad(q, ((0, Mp - M), (0, 0)))
    if Np != N:
        p = jnp.pad(p, ((0, Np - N), (0, 0)))

    out = pl.pallas_call(
        similarity_kernel,
        out_shape=jax.ShapeDtypeStruct((Mp, Np), jnp.float32),
        grid_spec=pltpu.PrefetchScalarGridSpec(
            num_scalar_prefetch=0,
            grid=(Mp // tm, Np // tn),
            in_specs=[pl.BlockSpec((tm, D), lambda i, j: (i, 0)),
                      pl.BlockSpec((tn, D), lambda i, j: (j, 0))],
            out_specs=pl.BlockSpec((tm, tn), lambda i, j: (i, j))),
        compiler_params=pltpu.CompilerParams(
            dimension_semantics=("parallel", "parallel")),
    )(q, p)
    return out[:M, :N]


# ---------------------------------------------------------------------------
# Training branch: fused extend_multi kernel
#   (2 x gated TransformerEncoderLayer + CLS-vs-candidate scoring in ONE call)
# ---------------------------------------------------------------------------

def _layer_norm(x, w, b, eps=1e-5):
    mu = jnp.mean(x, axis=-1, keepdims=True)
    var = jnp.mean((x - mu) ** 2, axis=-1, keepdims=True)
    return (x - mu) * jax.lax.rsqrt(var + eps) * w + b


def fused_extend_kernel(gates_ref, x_ref,
                        wqkv_ref, bqkv_ref, wo_ref, bo_ref,
                        ln1w_ref, ln1b_ref, w1_ref, b1_ref,
                        w2_ref, b2_ref, ln2w_ref, ln2b_ref,
                        scores_ref, *, num_heads, num_layers):
    """Both IdentityInitializedTransformerEncoderLayer's + bmm scoring.

    Per layer (PyTorch default TransformerEncoderLayer, post-LN, ReLU, eval):
      out = sigmoid(w) * layer(src) + (1 - sigmoid(w)) * src
    Weights arrive pre-transposed (x @ W layout) and in bf16; all matmuls
    (including the attention einsums) use bf16 operands with f32 accumulation;
    LayerNorm / softmax / residual / gate stay in f32.
    """
    # TODO(synk): dropout inside the torch layer is stochastic in train mode;
    #             eval-mode (identity) semantics are implemented here.
    x3 = x_ref[...].astype(jnp.float32)          # (bB, L, D)
    bB, L, D = x3.shape
    n = bB * L
    H = num_heads
    Dh = D // H
    scale = 1.0 / math.sqrt(Dh)

    h = x3.reshape(n, D)
    for layer in range(num_layers):
        x = h
        xb = x.astype(jnp.bfloat16)

        # ---- in-projection: (n, D) @ (D, 3D), f32 accumulate ----
        qkv = jnp.dot(xb, wqkv_ref[layer],
                      preferred_element_type=jnp.float32) + bqkv_ref[layer]

        # ---- per-head attention; out-projection folded per head ----
        # concat(heads) @ Wo == sum_h head_h @ Wo[h*Dh:(h+1)*Dh, :]
        # -> no lane-axis concatenate / relayout.
        wo_l = wo_ref[layer]                     # (D, D) bf16, VMEM resident
        attn = None
        for hh in range(H):
            lo = hh * Dh                          # 0, 384 -> lane-aligned slices
            qh = qkv[:, 0 * D + lo:0 * D + lo + Dh].reshape(bB, L, Dh)
            kh = qkv[:, 1 * D + lo:1 * D + lo + Dh].reshape(bB, L, Dh)
            vh = qkv[:, 2 * D + lo:2 * D + lo + Dh].reshape(bB, L, Dh)
            s = jnp.einsum("bqd,bkd->bqk",
                           qh.astype(jnp.bfloat16), kh.astype(jnp.bfloat16),
                           preferred_element_type=jnp.float32) * scale
            s = s - jnp.max(s, axis=-1, keepdims=True)
            p = jnp.exp(s)
            p = p * pl.reciprocal(jnp.sum(p, axis=-1, keepdims=True), approx=True)
            oh = jnp.einsum("bqk,bkd->bqd",
                            p.astype(jnp.bfloat16), vh.astype(jnp.bfloat16),
                            preferred_element_type=jnp.float32)  # (bB, L, Dh)
            part = jnp.dot(oh.reshape(n, Dh).astype(jnp.bfloat16),
                           wo_l[lo:lo + Dh, :],
                           preferred_element_type=jnp.float32)
            attn = part if attn is None else attn + part
        attn = attn + bo_ref[layer]

        # ---- residual + LayerNorm 1 ----
        h1 = _layer_norm(x + attn, ln1w_ref[layer], ln1b_ref[layer])

        # ---- feed forward (ReLU), bf16 matmuls / f32 accum ----
        ff = jnp.dot(h1.astype(jnp.bfloat16), w1_ref[layer],
                     preferred_element_type=jnp.float32) + b1_ref[layer]
        ff = jnp.maximum(ff, 0.0)
        ff = jnp.dot(ff.astype(jnp.bfloat16), w2_ref[layer],
                     preferred_element_type=jnp.float32) + b2_ref[layer]

        # ---- residual + LayerNorm 2 ----
        h2 = _layer_norm(h1 + ff, ln2w_ref[layer], ln2b_ref[layer])

        # ---- identity-initialized gate ----
        g = gates_ref[layer]                      # scalar from SMEM
        h = g * h2 + (1.0 - g) * x

    # scores = bmm(h[:, 0, :].unsqueeze(1), h[:, 1:, :].transpose(2, 1)).squeeze(-2)
    h = h.reshape(bB, L, D)
    cls = h[:, 0:1, :]                            # (bB, 1, D)
    rest = h[:, 1:, :]                            # (bB, K, D)
    s = jnp.sum(cls * rest, axis=-1)              # (bB, K) f32
    K = L - 1
    Kp = scores_ref.shape[-1]
    if Kp > K:
        # Lane-dense output block: pad to a multiple of 128 and store once
        # (unmasked vst); wrapper slices back to K.
        s = jnp.concatenate(
            [s, jnp.zeros((bB, Kp - K), jnp.float32)], axis=-1)
    scores_ref[...] = s.astype(scores_ref.dtype)


def _choose_bb(B, L, weight_bytes, vmem_limit):
    """Batch tile: fill the MXU M-dim (bb*L >= 256) where B allows, keep >= 2
    grid steps when possible (v7x megacore), and keep f32 intermediates in VMEM."""
    candidates = [d for d in range(8, B + 1, 8) if B % d == 0]
    if not candidates:
        return B                                  # B not a multiple of 8
    # Rough per-row f32 intermediate footprint: qkv (3D) + ff (F) + ~8 (n,D) temps.
    per_row = (3 * EMBED_DIM + DIM_FEEDFORWARD + 8 * EMBED_DIM) * 4
    budget = max(vmem_limit - weight_bytes - (8 << 20), 4 << 20)
    feasible = [d for d in candidates if d * L * per_row <= budget]
    if not feasible:
        feasible = candidates[:1]
    filled_multi = [d for d in feasible if d * L >= 256 and B // d >= 2]
    if filled_multi:
        return min(filled_multi)                  # MXU-filling AND >= 2 steps
    filled = [d for d in feasible if d * L >= 256]
    if filled:
        return min(filled)
    multi = [d for d in feasible if B // d >= 2]
    if multi:
        return max(multi)                         # fewest steps, still >= 2
    return max(feasible)


def _resident_spec(a):
    # Full-array block + constant index_map -> operand stays VMEM-resident.
    # Buffered(1): no double-buffering for arrays that never change across the
    # grid (halves resident-weight VMEM; critical on v7x's 64 MiB).
    idx = lambda i, nd=a.ndim: (0,) * nd
    try:
        return pl.BlockSpec(a.shape, idx, pipeline_mode=pl.Buffered(1))
    except TypeError:                             # very old jax: no pipeline_mode
        return pl.BlockSpec(a.shape, idx)


def extend_multi(q_reps, p_reps, params):
    """Training-branch scoring path of EncoderModel.forward (single fused call)."""
    B, D = q_reps.shape
    assert p_reps.shape[0] % B == 0, "p_reps rows must be a multiple of q_reps rows"
    xs = q_reps[:, None, :]                       # (B, 1, D)
    ys = p_reps.reshape(B, -1, D)                 # (B, K, D)
    inp = jnp.concatenate([xs, ys], axis=1).astype(jnp.float32)   # (B, 1+K, D)
    L = inp.shape[1]
    K = L - 1
    Kp = _round_up(K, 128)                        # lane-dense scores block

    layers = params["layers"]

    def stack(name, dtype=None):
        a = jnp.stack([lp[name] for lp in layers], axis=0)
        return a.astype(dtype if dtype is not None else jnp.float32)

    # Big matrices in bf16 (halves HBM traffic & VMEM, bf16-native MXU);
    # biases / LN params stay f32.
    wqkv = stack("wqkv", jnp.bfloat16)            # (nl, D, 3D)  x @ W layout
    bqkv = stack("bqkv")                          # (nl, 3D)
    wo = stack("wo", jnp.bfloat16)                # (nl, D, D)
    bo = stack("bo")
    ln1w, ln1b = stack("ln1w"), stack("ln1b")
    w1 = stack("w1", jnp.bfloat16)                # (nl, D, F)
    b1 = stack("b1")
    w2 = stack("w2", jnp.bfloat16)                # (nl, F, D)
    b2 = stack("b2")
    ln2w, ln2b = stack("ln2w"), stack("ln2b")
    gates = jax.nn.sigmoid(
        jnp.stack([lp["gate_logit"] for lp in layers])).astype(jnp.float32)  # (nl,)

    weight_args = (wqkv, bqkv, wo, bo, ln1w, ln1b, w1, b1, w2, b2, ln2w, ln2b)
    weight_bytes = sum(int(a.size) * a.dtype.itemsize for a in weight_args)

    # Generation-aware VMEM budget: >= 16 MiB headroom under physical capacity
    # (v7x: ~48 MiB), capped at ~100 MiB on 128-MiB parts (v5e/v6e).
    vmem_cap = _vmem_capacity_bytes()
    vmem_limit = max(min(vmem_cap - (16 << 20), 100 << 20), 32 << 20)

    bb = _choose_bb(B, L, weight_bytes, vmem_limit)
    grid = (B // bb,)

    kernel = functools.partial(fused_extend_kernel,
                               num_heads=NUM_HEADS, num_layers=NUM_LAYERS)
    scores = pl.pallas_call(
        kernel,
        out_shape=jax.ShapeDtypeStruct((B, Kp), jnp.float32),
        grid_spec=pltpu.PrefetchScalarGridSpec(
            num_scalar_prefetch=0,
            grid=grid,
            in_specs=([pl.BlockSpec(memory_space=pltpu.MemorySpace.SMEM),
                       pl.BlockSpec((bb, L, D), lambda i: (i, 0, 0))]
                      + [_resident_spec(a) for a in weight_args]),
            out_specs=pl.BlockSpec((bb, Kp), lambda i: (i, 0))),
        compiler_params=pltpu.CompilerParams(
            dimension_semantics=("parallel",),
            vmem_limit_bytes=vmem_limit),
    )(gates, inp, *weight_args)
    # scores.view(q_reps.size(0), -1): slice the lane padding back off.
    return scores[:, :K]


# ---------------------------------------------------------------------------
# EncoderModel.forward mirror
# ---------------------------------------------------------------------------

def encoder_model_forward(q_reps, p_reps, params, training=False):
    """Eval path returns cleanly; training path computes the student scores/loss."""
    if not training:
        scores = compute_similarity(q_reps, p_reps)
        return {"loss": None, "scores": scores, "q_reps": q_reps, "p_reps": p_reps}
    scores = extend_multi(q_reps, p_reps, params)
    # cross_entropy(scores, target=0) -- cheap glue reduction in plain JAX.
    logp = jax.nn.log_softmax(scores, axis=-1)
    student_loss = -jnp.mean(logp[:, 0])
    # TODO(synk): the PyTorch training branch raises Exception('encoder') before
    #             returning; the teacher/distillation path is unreachable and
    #             depends on abstract encode_* methods, so it is not modeled.
    return {"loss": student_loss, "scores": scores,
            "q_reps": q_reps, "p_reps": p_reps}


# ---------------------------------------------------------------------------
# Deterministic parameter init (synthetic).  Weights are stored pre-transposed
# in the x @ W layout so the kernel never transposes in front of the MXU.
# ---------------------------------------------------------------------------

def init_layer_params(key, d_model, dim_ff):
    ks = jax.random.split(key, 4)
    s = 0.02
    return {
        "wqkv": jax.random.normal(ks[0], (d_model, 3 * d_model), jnp.float32) * s,
        "bqkv": jnp.zeros((3 * d_model,), jnp.float32),
        "wo":   jax.random.normal(ks[1], (d_model, d_model), jnp.float32) * s,
        "bo":   jnp.zeros((d_model,), jnp.float32),
        "ln1w": jnp.ones((d_model,), jnp.float32),
        "ln1b": jnp.zeros((d_model,), jnp.float32),
        "w1":   jax.random.normal(ks[2], (d_model, dim_ff), jnp.float32) * s,
        "b1":   jnp.zeros((dim_ff,), jnp.float32),
        "w2":   jax.random.normal(ks[3], (dim_ff, d_model), jnp.float32) * s,
        "b2":   jnp.zeros((d_model,), jnp.float32),
        "ln2w": jnp.ones((d_model,), jnp.float32),
        "ln2b": jnp.zeros((d_model,), jnp.float32),
        "gate_logit": jnp.array(-5.0, jnp.float32),   # nn.Parameter([-5.0])
    }


def init_params(key):
    keys = jax.random.split(key, NUM_LAYERS)
    return {"layers": [init_layer_params(k, EMBED_DIM, DIM_FEEDFORWARD)
                       for k in keys]}


# ---------------------------------------------------------------------------
# Main
# ---------------------------------------------------------------------------

if __name__ == "__main__":
    key = jax.random.PRNGKey(0)
    k_q, k_p, k_params = jax.random.split(key, 3)

    num_queries = 16
    passages_per_query = 2
    num_passages = num_queries * passages_per_query

    # encode_query / encode_passage are abstract in the torch class;
    # representations are synthesized directly (embed_dim=768 is hardcoded).
    q_reps = jax.random.normal(k_q, (num_queries, EMBED_DIM), jnp.float32)
    p_reps = jax.random.normal(k_p, (num_passages, EMBED_DIM), jnp.float32)

    params = init_params(k_params)

    # Eval branch: compute_similarity (gridded bf16 NT-matmul kernel).
    eval_out = encoder_model_forward(q_reps, p_reps, params, training=False)
    # Training branch: fused gated-transformer + scoring kernel.
    train_out = encoder_model_forward(q_reps, p_reps, params, training=True)

    jax.block_until_ready((eval_out["scores"], train_out["scores"],
                           train_out["loss"]))

    assert eval_out["scores"].shape == (num_queries, num_passages)
    assert train_out["scores"].shape == (num_queries, passages_per_query)
    assert bool(jnp.isfinite(train_out["loss"]))

    print("KERNEL_OK")
</pallas_src>

<mosaic_0001>
module attributes {stable_mosaic.version = 11 : i64} {
  func.func @similarity_kernel(%arg0: i32, %arg1: i32, %arg2: memref<16x768xbf16, #tpu.memory_space<vmem>>, %arg3: memref<128x768xbf16, #tpu.memory_space<vmem>>, %arg4: memref<16x128xf32, #tpu.memory_space<vmem>>) attributes {dimension_semantics = [#tpu.dimension_semantics<parallel>, #tpu.dimension_semantics<parallel>], iteration_bounds = array<i64: 1, 1>, scalar_prefetch = 0 : i64, scratch_operands = 0 : i64, tpu.core_type = #tpu.core_type<tc>, window_params = [{transform_indices = @transform_0, window_bounds = array<i64: 16, 768>}, {transform_indices = @transform_1, window_bounds = array<i64: 128, 768>}, {transform_indices = @transform_2, window_bounds = array<i64: 16, 128>}]} {
    %c0 = arith.constant 0 : index
    %c0_0 = arith.constant 0 : index
    %0 = vector.load %arg2[%c0, %c0_0] : memref<16x768xbf16, #tpu.memory_space<vmem>>, vector<16x768xbf16>
    %c0_1 = arith.constant 0 : index
    %c0_2 = arith.constant 0 : index
    %1 = vector.load %arg3[%c0_1, %c0_2] : memref<128x768xbf16, #tpu.memory_space<vmem>>, vector<128x768xbf16>
    %cst = arith.constant dense<0.000000e+00> : vector<16x128xf32>
    %2 = tpu.matmul %0, %1, %cst {dimension_numbers = #tpu.dot_dimension_numbers<[1], [1], [0], [0], [0, 0, 1, 0], [], []>} : vector<16x768xbf16>, vector<128x768xbf16>, vector<16x128xf32> -> vector<16x128xf32>
    %c0_3 = arith.constant 0 : index
    %c0_4 = arith.constant 0 : index
    %3 = vector.load %arg4[%c0_3, %c0_4] : memref<16x128xf32, #tpu.memory_space<vmem>>, vector<16x128xf32>
    tpu.vector_store %arg4[%c0_3, %c0_4], %2 {strides = array<i32>} : memref<16x128xf32, #tpu.memory_space<vmem>>, vector<16x128xf32>,
    return
  }
  func.func @transform_0(%arg0: i32, %arg1: i32) -> (i32, i32) {
    %c0_i32 = arith.constant 0 : i32
    %c0_i32_0 = arith.constant 0 : i32
    return %arg0, %c0_i32 : i32, i32
  }
  func.func @transform_1(%arg0: i32, %arg1: i32) -> (i32, i32) {
    %c0_i32 = arith.constant 0 : i32
    %c0_i32_0 = arith.constant 0 : i32
    return %arg1, %c0_i32 : i32, i32
  }
  func.func @transform_2(%arg0: i32, %arg1: i32) -> (i32, i32) {
    %c0_i32 = arith.constant 0 : i32
    return %arg0, %arg1 : i32, i32
  }
}

</mosaic_0001>

<llo_original>
// kernel: tpu_custom_call.1
$region0: #{tpu_custom_call.1}
  #allocation0 [shape = 'u32[]', space=smem, size = 0x4, offset = 0x4, fixed_abs, tag = 'smem constant byte address 0x4 - core index']
  #allocation1 [shape = 'u32[144,128]{1,0:T(1,128)}', space=vmem, size = 0x12000, scoped, tag = 'internal scratch']
  %s0 = inlined_call_operand.hbm [shape: bf16[16,768], index: 0, kind: input, shape index: {}]
  %s1 = inlined_call_operand.hbm [shape: bf16[128,768], index: 1, kind: input, shape index: {}]
  %s2 = inlined_call_operand.hbm [shape: f32[16,128], index: 2, kind: output, shape index: {}]
  %s3 = sld [smem:[#allocation0]]
  $region26: #{tpu_custom_call.1} parent=0
    _
  %s5 = ssub.s32 1, %s3
  %s6 = scalar_select 0, %s5, %s3
  $region1: #{tpu_custom_call.1} parent=0
    #allocation2 [shape = 'u8[24576]{0}', space=vmem, size = 0x6000, scoped, tag = 'input window, operand 0, single buffered']
    #allocation3 [shape = 's32[1]{0}', space=sflag, size = 0x4, scoped, tag = 'scoped memory for tpu_custom_call.1']
    #allocation4 [shape = 's32[1]{0}', space=sflag, size = 0x4, scoped, tag = 'scoped memory for tpu_custom_call.1']
    #allocation5 [shape = 'u8[196608]{0}', space=vmem, size = 0x30000, scoped, tag = 'input window, operand 1, single buffered']
    #allocation6 [shape = 's32[1]{0}', space=sflag, size = 0x4, scoped, tag = 'scoped memory for tpu_custom_call.1']
    #allocation7 [shape = 'u8[8192]{0}', space=vmem, size = 0x2000, scoped, tag = 'output window, operand 0, single buffered']
    %7 = vsyncpa [#allocation3], 0
    %8 = vsyncpa [#allocation6], 0
    %9 = vsyncpa [#allocation4], 0
    // Predicated region
    $region2: #{tpu_custom_call.1} parent=1 // pred_check
      _
    $region3: #{tpu_custom_call.1} parent=1 // pred_check_branch
      %11 = sbr.rel (0) target = $region5
    $region4: #{tpu_custom_call.1} parent=1 // pred_region
      %s13 = ssub.s32 768, 768
      %14 = vsyncadd [#allocation3], %s13
      %s15 = sshll.u32 [#allocation2], 4
      %s16 = int_to_ptr.vmem [resolvable:$true] %s15
      %21 = dma.hbm_to_vmem [thread:$0]  %s0, 768, %s16, [#allocation3], 384, 384, 24
    $region5: #{tpu_custom_call.1} parent=1 // pred_fallthru
      _
    // Predicated region
    $region6: #{tpu_custom_call.1} parent=1 // pred_check
      _
    $region7: #{tpu_custom_call.1} parent=1 // pred_check_branch
      %23 = sbr.rel (0) target = $region9
    $region8: #{tpu_custom_call.1} parent=1 // pred_region
      %s25 = ssub.s32 6144, 6144
      %26 = vsyncadd [#allocation6], %s25
      %s27 = sshll.u32 [#allocation5], 4
      %s28 = int_to_ptr.vmem [resolvable:$true] %s27
      %33 = dma.hbm_to_vmem [thread:$0]  %s1, 6144, %s28, [#allocation6], 384, 384, 24
    $region9: #{tpu_custom_call.1} parent=1 // pred_fallthru
      _
    // Predicated region
    $region10: #{tpu_custom_call.1} parent=1 // pred_check
      _
    $region11: #{tpu_custom_call.1} parent=1 // pred_check_branch
      %35 = sbr.rel (0) target = $region13
    $region12: #{tpu_custom_call.1} parent=1 // pred_region
      %36 = dma.done [#allocation3], 768
    $region13: #{tpu_custom_call.1} parent=1 // pred_fallthru
      _
    // Predicated region
    $region14: #{tpu_custom_call.1} parent=1 // pred_check
      _
    $region15: #{tpu_custom_call.1} parent=1 // pred_check_branch
      %38 = sbr.rel (0) target = $region17
    $region16: #{tpu_custom_call.1} parent=1 // pred_region
      %39 = dma.done [#allocation6], 6144
    $region17: #{tpu_custom_call.1} parent=1 // pred_fallthru
      _
    %v41 = vld [vmem:[#allocation2] sm:$0xff]
    %v42 = vld [vmem:[#allocation2 + $0x8] sm:$0xff]
    %v43 = vld [vmem:[#allocation2 + $0x10] sm:$0xff]
    %v44 = vld [vmem:[#allocation2 + $0x18] sm:$0xff]
    %v45 = vld [vmem:[#allocation2 + $0x20] sm:$0xff]
    %v46 = vld [vmem:[#allocation2 + $0x28] sm:$0xff]
    %v47 = vld [vmem:[#allocation5] sm:$0xff]
    %v48 = vld [vmem:[#allocation5 + $0x8] sm:$0xff]
    %v49 = vld [vmem:[#allocation5 + $0x10] sm:$0xff]
    %v50 = vld [vmem:[#allocation5 + $0x18] sm:$0xff]
    %v51 = vld [vmem:[#allocation5 + $0x20] sm:$0xff]
    %v52 = vld [vmem:[#allocation5 + $0x28] sm:$0xff]
    %v53 = vld [vmem:[#allocation5 + $0x30] sm:$0xff]
    %v54 = vld [vmem:[#allocation5 + $0x38] sm:$0xff]
    %v55 = vld [vmem:[#allocation5 + $0x40] sm:$0xff]
    %v56 = vld [vmem:[#allocation5 + $0x48] sm:$0xff]
    %v57 = vld [vmem:[#allocation5 + $0x50] sm:$0xff]
    %v58 = vld [vmem:[#allocation5 + $0x58] sm:$0xff]
    %v59 = vld [vmem:[#allocation5 + $0x60] sm:$0xff]
    %v60 = vld [vmem:[#allocation5 + $0x68] sm:$0xff]
    %v61 = vld [vmem:[#allocation5 + $0x70] sm:$0xff]
    %v62 = vld [vmem:[#allocation5 + $0x78] sm:$0xff]
    %v63 = vld [vmem:[#allocation5 + $0x80] sm:$0xff]
    %v64 = vld [vmem:[#allocation5 + $0x88] sm:$0xff]
    %v65 = vld [vmem:[#allocation5 + $0x90] sm:$0xff]
    %v66 = vld [vmem:[#allocation5 + $0x98] sm:$0xff]
    %v67 = vld [vmem:[#allocation5 + $0xa0] sm:$0xff]
    %v68 = vld [vmem:[#allocation5 + $0xa8] sm:$0xff]
    %v69 = vld [vmem:[#allocation5 + $0xb0] sm:$0xff]
    %v70 = vld [vmem:[#allocation5 + $0xb8] sm:$0xff]
    %v71 = vld [vmem:[#allocation5 + $0xc0] sm:$0xff]
    %v72 = vld [vmem:[#allocation5 + $0xc8] sm:$0xff]
    %v73 = vld [vmem:[#allocation5 + $0xd0] sm:$0xff]
    %v74 = vld [vmem:[#allocation5 + $0xd8] sm:$0xff]
    %v75 = vld [vmem:[#allocation5 + $0xe0] sm:$0xff]
    %v76 = vld [vmem:[#allocation5 + $0xe8] sm:$0xff]
    %v77 = vld [vmem:[#allocation5 + $0xf0] sm:$0xff]
    %v78 = vld [vmem:[#allocation5 + $0xf8] sm:$0xff]
    %v79 = vld [vmem:[#allocation5 + $0x100] sm:$0xff]
    %v80 = vld [vmem:[#allocation5 + $0x108] sm:$0xff]
    %v81 = vld [vmem:[#allocation5 + $0x110] sm:$0xff]
    %v82 = vld [vmem:[#allocation5 + $0x118] sm:$0xff]
    %v83 = vld [vmem:[#allocation5 + $0x120] sm:$0xff]
    %v84 = vld [vmem:[#allocation5 + $0x128] sm:$0xff]
    %v85 = vld [vmem:[#allocation5 + $0x130] sm:$0xff]
    %v86 = vld [vmem:[#allocation5 + $0x138] sm:$0xff]
    %v87 = vld [vmem:[#allocation5 + $0x140] sm:$0xff]
    %v88 = vld [vmem:[#allocation5 + $0x148] sm:$0xff]
    %v89 = vld [vmem:[#allocation5 + $0x150] sm:$0xff]
    %v90 = vld [vmem:[#allocation5 + $0x158] sm:$0xff]
    %v91 = vld [vmem:[#allocation5 + $0x160] sm:$0xff]
    %v92 = vld [vmem:[#allocation5 + $0x168] sm:$0xff]
    %v93 = vld [vmem:[#allocation5 + $0x170] sm:$0xff]
    %v94 = vld [vmem:[#allocation5 + $0x178] sm:$0xff]
    %v101 = vunpack.c.l.b16 %v41
    %v102 = vunpack.c.h.b16 %v41
    %v103 = vunpack.c.l.b16 %v42
    %v104 = vunpack.c.h.b16 %v42
    %v105 = vunpack.c.l.b16 %v43
    %v106 = vunpack.c.h.b16 %v43
    %v107 = vunpack.c.l.b16 %v44
    %v108 = vunpack.c.h.b16 %v44
    %v109 = vunpack.c.l.b16 %v45
    %v110 = vunpack.c.h.b16 %v45
    %v111 = vunpack.c.l.b16 %v46
    %v112 = vunpack.c.h.b16 %v46
    %v113 = vpack.c.b16 %v107, %v101
    %v114 = vpack.c.b16 %v108, %v102
    %v115 = vpack.c.b16 %v109, %v103
    %v116 = vpack.c.b16 %v110, %v104
    %v117 = vpack.c.b16 %v111, %v105
    %v118 = vpack.c.b16 %v112, %v106
    %v173 = vunpack.c.l.b16 %v47
    %v174 = vunpack.c.h.b16 %v47
    %v175 = vunpack.c.l.b16 %v48
    %v176 = vunpack.c.h.b16 %v48
    %v177 = vunpack.c.l.b16 %v49
    %v178 = vunpack.c.h.b16 %v49
    %v179 = vunpack.c.l.b16 %v50
    %v180 = vunpack.c.h.b16 %v50
    %v181 = vunpack.c.l.b16 %v51
    %v182 = vunpack.c.h.b16 %v51
    %v183 = vunpack.c.l.b16 %v52
    %v184 = vunpack.c.h.b16 %v52
    %v185 = vunpack.c.l.b16 %v53
    %v186 = vunpack.c.h.b16 %v53
    %v187 = vunpack.c.l.b16 %v54
    %v188 = vunpack.c.h.b16 %v54
    %v189 = vunpack.c.l.b16 %v55
    %v190 = vunpack.c.h.b16 %v55
    %v191 = vunpack.c.l.b16 %v56
    %v192 = vunpack.c.h.b16 %v56
    %v193 = vunpack.c.l.b16 %v57
    %v194 = vunpack.c.h.b16 %v57
    %v195 = vunpack.c.l.b16 %v58
    %v196 = vunpack.c.h.b16 %v58
    %v197 = vunpack.c.l.b16 %v59
    %v198 = vunpack.c.h.b16 %v59
    %v199 = vunpack.c.l.b16 %v60
    %v200 = vunpack.c.h.b16 %v60
    %v201 = vunpack.c.l.b16 %v61
    %v202 = vunpack.c.h.b16 %v61
    %v203 = vunpack.c.l.b16 %v62
    %v204 = vunpack.c.h.b16 %v62
    %v205 = vunpack.c.l.b16 %v63
    %v206 = vunpack.c.h.b16 %v63
    %v207 = vunpack.c.l.b16 %v64
    %v208 = vunpack.c.h.b16 %v64
    %v209 = vunpack.c.l.b16 %v65
    %v210 = vunpack.c.h.b16 %v65
    %v211 = vunpack.c.l.b16 %v66
    %v212 = vunpack.c.h.b16 %v66
    %v213 = vunpack.c.l.b16 %v67
    %v214 = vunpack.c.h.b16 %v67
    %v215 = vunpack.c.l.b16 %v68
    %v216 = vunpack.c.h.b16 %v68
    %v217 = vunpack.c.l.b16 %v69
    %v218 = vunpack.c.h.b16 %v69
    %v219 = vunpack.c.l.b16 %v70
    %v220 = vunpack.c.h.b16 %v70
    %v221 = vunpack.c.l.b16 %v71
    %v222 = vunpack.c.h.b16 %v71
    %v223 = vunpack.c.l.b16 %v72
    %v224 = vunpack.c.h.b16 %v72
    %v225 = vunpack.c.l.b16 %v73
    %v226 = vunpack.c.h.b16 %v73
    %v227 = vunpack.c.l.b16 %v74
    %v228 = vunpack.c.h.b16 %v74
    %v229 = vunpack.c.l.b16 %v75
    %v230 = vunpack.c.h.b16 %v75
    %v231 = vunpack.c.l.b16 %v76
    %v232 = vunpack.c.h.b16 %v76
    %v233 = vunpack.c.l.b16 %v77
    %v234 = vunpack.c.h.b16 %v77
    %v235 = vunpack.c.l.b16 %v78
    %v236 = vunpack.c.h.b16 %v78
    %v237 = vunpack.c.l.b16 %v79
    %v238 = vunpack.c.h.b16 %v79
    %v239 = vunpack.c.l.b16 %v80
    %v240 = vunpack.c.h.b16 %v80
    %v241 = vunpack.c.l.b16 %v81
    %v242 = vunpack.c.h.b16 %v81
    %v243 = vunpack.c.l.b16 %v82
    %v244 = vunpack.c.h.b16 %v82
    %v245 = vunpack.c.l.b16 %v83
    %v246 = vunpack.c.h.b16 %v83
    %v247 = vunpack.c.l.b16 %v84
    %v248 = vunpack.c.h.b16 %v84
    %v249 = vunpack.c.l.b16 %v85
    %v250 = vunpack.c.h.b16 %v85
    %v251 = vunpack.c.l.b16 %v86
    %v252 = vunpack.c.h.b16 %v86
    %v253 = vunpack.c.l.b16 %v87
    %v254 = vunpack.c.h.b16 %v87
    %v255 = vunpack.c.l.b16 %v88
    %v256 = vunpack.c.h.b16 %v88
    %v257 = vunpack.c.l.b16 %v89
    %v258 = vunpack.c.h.b16 %v89
    %v259 = vunpack.c.l.b16 %v90
    %v260 = vunpack.c.h.b16 %v90
    %v261 = vunpack.c.l.b16 %v91
    %v262 = vunpack.c.h.b16 %v91
    %v263 = vunpack.c.l.b16 %v92
    %v264 = vunpack.c.h.b16 %v92
    %v265 = vunpack.c.l.b16 %v93
    %v266 = vunpack.c.h.b16 %v93
    %v267 = vunpack.c.l.b16 %v94
    %v268 = vunpack.c.h.b16 %v94
    %v269 = vpack.c.b16 %v179, %v173
    %v270 = vpack.c.b16 %v180, %v174
    %v271 = vpack.c.b16 %v181, %v175
    %v272 = vpack.c.b16 %v182, %v176
    %v273 = vpack.c.b16 %v183, %v177
    %v274 = vpack.c.b16 %v184, %v178
    %v275 = vpack.c.b16 %v191, %v185
    %v276 = vpack.c.b16 %v192, %v186
    %v277 = vpack.c.b16 %v193, %v187
    %v278 = vpack.c.b16 %v194, %v188
    %v279 = vpack.c.b16 %v195, %v189
    %v280 = vpack.c.b16 %v196, %v190
    %v281 = vpack.c.b16 %v203, %v197
    %v282 = vpack.c.b16 %v204, %v198
    %v283 = vpack.c.b16 %v205, %v199
    %v284 = vpack.c.b16 %v206, %v200
    %v285 = vpack.c.b16 %v207, %v201
    %v286 = vpack.c.b16 %v208, %v202
    %v287 = vpack.c.b16 %v215, %v209
    %v288 = vpack.c.b16 %v216, %v210
    %v289 = vpack.c.b16 %v217, %v211
    %v290 = vpack.c.b16 %v218, %v212
    %v291 = vpack.c.b16 %v219, %v213
    %v292 = vpack.c.b16 %v220, %v214
    %v293 = vpack.c.b16 %v227, %v221
    %v294 = vpack.c.b16 %v228, %v222
    %v295 = vpack.c.b16 %v229, %v223
    %v296 = vpack.c.b16 %v230, %v224
    %v297 = vpack.c.b16 %v231, %v225
    %v298 = vpack.c.b16 %v232, %v226
    %v299 = vpack.c.b16 %v239, %v233
    %v300 = vpack.c.b16 %v240, %v234
    %v301 = vpack.c.b16 %v241, %v235
    %v302 = vpack.c.b16 %v242, %v236
    %v303 = vpack.c.b16 %v243, %v237
    %v304 = vpack.c.b16 %v244, %v238
    %v305 = vpack.c.b16 %v251, %v245
    %v306 = vpack.c.b16 %v252, %v246
    %v307 = vpack.c.b16 %v253, %v247
    %v308 = vpack.c.b16 %v254, %v248
    %v309 = vpack.c.b16 %v255, %v249
    %v310 = vpack.c.b16 %v256, %v250
    %v311 = vpack.c.b16 %v263, %v257
    %v312 = vpack.c.b16 %v264, %v258
    %v313 = vpack.c.b16 %v265, %v259
    %v314 = vpack.c.b16 %v266, %v260
    %v315 = vpack.c.b16 %v267, %v261
    %v316 = vpack.c.b16 %v268, %v262
    %365 = vmatprep.subr.bf16.mxu0 %v270
    %366 = vmatpush1.bf16.xpose.msra.mxu0 %v269
    %367 = vmatprep.subr.bf16.mxu0 %v276
    %368 = vmatpush1.bf16.xpose.msra.mxu0 %v275
    %369 = vmatprep.subr.bf16.mxu0 %v282
    %370 = vmatpush1.bf16.xpose.msra.mxu0 %v281
    %371 = vmatprep.subr.bf16.mxu0 %v288
    %372 = vmatpush1.bf16.xpose.msra.mxu0 %v287
    %373 = vmatprep.subr.bf16.mxu0 %v294
    %374 = vmatpush1.bf16.xpose.msra.mxu0 %v293
    %375 = vmatprep.subr.bf16.mxu0 %v300
    %376 = vmatpush1.bf16.xpose.msra.mxu0 %v299
    %377 = vmatprep.subr.bf16.mxu0 %v306
    %378 = vmatpush1.bf16.xpose.msra.mxu0 %v305
    %379 = vmatprep.subr.bf16.mxu0 %v312
    %380 = vmatpush1.bf16.xpose.msra.mxu0 %v311
    %381 = vmatprep.subr.bf16.mxu0 0
    %382 = vmatpush1.bf16.xpose.msra.mxu0 0
    %383 = vmatprep.subr.bf16.mxu0 0
    %384 = vmatpush1.bf16.xpose.msra.mxu0 0
    %385 = vmatprep.subr.bf16.mxu0 0
    %386 = vmatpush1.bf16.xpose.msra.mxu0 0
    %387 = vmatprep.subr.bf16.mxu0 0
    %388 = vmatpush1.bf16.xpose.msra.mxu0 0
    %389 = vmatprep.subr.bf16.mxu0 0
    %390 = vmatpush1.bf16.xpose.msra.mxu0 0
    %391 = vmatprep.subr.bf16.mxu0 0
    %392 = vmatpush1.bf16.xpose.msra.mxu0 0
    %393 = vmatprep.subr.bf16.mxu0 0
    %394 = vmatpush1.bf16.xpose.msra.mxu0 0
    %395 = vmatprep.subr.bf16.mxu0 0
    %396 = vmatpush1.bf16.xpose.msra.mxu0 0
    %397 = vmatprep.mubr.bf16.mxu0 %v114
    %398 = vmatmul.mubr.bf16.gmra.mrb[0].mxu0 %v113
    %v399 = vpop.f32.mrb[0].mxu0
    %v400 = vadd.f32 0.0, %v399
    %v401 = vpop.f32.mrb[0].mxu0
    %v402 = vpop.f32.mrb[0].mxu0
    %v403 = vadd.f32 0.0, %v402
    %v404 = vpop.f32.mrb[0].mxu0
    %405 = vdwg.mxu0
    %406 = vmatprep.subr.bf16.mxu0 %v272
    %407 = vmatpush1.bf16.xpose.msra.mxu0 %v271
    %408 = vmatprep.subr.bf16.mxu0 %v278
    %409 = vmatpush1.bf16.xpose.msra.mxu0 %v277
    %410 = vmatprep.subr.bf16.mxu0 %v284
    %411 = vmatpush1.bf16.xpose.msra.mxu0 %v283
    %412 = vmatprep.subr.bf16.mxu0 %v290
    %413 = vmatpush1.bf16.xpose.msra.mxu0 %v289
    %414 = vmatprep.subr.bf16.mxu0 %v296
    %415 = vmatpush1.bf16.xpose.msra.mxu0 %v295
    %416 = vmatprep.subr.bf16.mxu0 %v302
    %417 = vmatpush1.bf16.xpose.msra.mxu0 %v301
    %418 = vmatprep.subr.bf16.mxu0 %v308
    %419 = vmatpush1.bf16.xpose.msra.mxu0 %v307
    %420 = vmatprep.subr.bf16.mxu0 %v314
    %421 = vmatpush1.bf16.xpose.msra.mxu0 %v313
    %422 = vmatprep.subr.bf16.mxu0 0
    %423 = vmatpush1.bf16.xpose.msra.mxu0 0
    %424 = vmatprep.subr.bf16.mxu0 0
    %425 = vmatpush1.bf16.xpose.msra.mxu0 0
    %426 = vmatprep.subr.bf16.mxu0 0
    %427 = vmatpush1.bf16.xpose.msra.mxu0 0
    %428 = vmatprep.subr.bf16.mxu0 0
    %429 = vmatpush1.bf16.xpose.msra.mxu0 0
    %430 = vmatprep.subr.bf16.mxu0 0
    %431 = vmatpush1.bf16.xpose.msra.mxu0 0
    %432 = vmatprep.subr.bf16.mxu0 0
    %433 = vmatpush1.bf16.xpose.msra.mxu0 0
    %434 = vmatprep.subr.bf16.mxu0 0
    %435 = vmatpush1.bf16.xpose.msra.mxu0 0
    %436 = vmatprep.subr.bf16.mxu0 0
    %437 = vmatpush1.bf16.xpose.msra.mxu0 0
    %438 = vmatprep.mubr.bf16.mxu0 %v116
    %439 = vmatmul.mubr.bf16.gmra.mrb[0].mxu0 %v115
    %v440 = vpop.f32.mrb[0].mxu0
    %v441 = vadd.f32 %v400, %v440
    %v442 = vpop.f32.mrb[0].mxu0
    %v443 = vpop.f32.mrb[0].mxu0
    %v444 = vadd.f32 %v403, %v443
    %v445 = vpop.f32.mrb[0].mxu0
    %446 = vdwg.mxu0
    %447 = vmatprep.subr.bf16.mxu0 %v274
    %448 = vmatpush1.bf16.xpose.msra.mxu0 %v273
    %449 = vmatprep.subr.bf16.mxu0 %v280
    %450 = vmatpush1.bf16.xpose.msra.mxu0 %v279
    %451 = vmatprep.subr.bf16.mxu0 %v286
    %452 = vmatpush1.bf16.xpose.msra.mxu0 %v285
    %453 = vmatprep.subr.bf16.mxu0 %v292
    %454 = vmatpush1.bf16.xpose.msra.mxu0 %v291
    %455 = vmatprep.subr.bf16.mxu0 %v298
    %456 = vmatpush1.bf16.xpose.msra.mxu0 %v297
    %457 = vmatprep.subr.bf16.mxu0 %v304
    %458 = vmatpush1.bf16.xpose.msra.mxu0 %v303
    %459 = vmatprep.subr.bf16.mxu0 %v310
    %460 = vmatpush1.bf16.xpose.msra.mxu0 %v309
    %461 = vmatprep.subr.bf16.mxu0 %v316
    %462 = vmatpush1.bf16.xpose.msra.mxu0 %v315
    %463 = vmatprep.subr.bf16.mxu0 0
    %464 = vmatpush1.bf16.xpose.msra.mxu0 0
    %465 = vmatprep.subr.bf16.mxu0 0
    %466 = vmatpush1.bf16.xpose.msra.mxu0 0
    %467 = vmatprep.subr.bf16.mxu0 0
    %468 = vmatpush1.bf16.xpose.msra.mxu0 0
    %469 = vmatprep.subr.bf16.mxu0 0
    %470 = vmatpush1.bf16.xpose.msra.mxu0 0
    %471 = vmatprep.subr.bf16.mxu0 0
    %472 = vmatpush1.bf16.xpose.msra.mxu0 0
    %473 = vmatprep.subr.bf16.mxu0 0
    %474 = vmatpush1.bf16.xpose.msra.mxu0 0
    %475 = vmatprep.subr.bf16.mxu0 0
    %476 = vmatpush1.bf16.xpose.msra.mxu0 0
    %477 = vmatprep.subr.bf16.mxu0 0
    %478 = vmatpush1.bf16.xpose.msra.mxu0 0
    %479 = vmatprep.mubr.bf16.mxu0 %v118
    %480 = vmatmul.mubr.bf16.gmra.mrb[0].mxu0 %v117
    %v481 = vpop.f32.mrb[0].mxu0
    %v482 = vadd.f32 %v441, %v481
    %v483 = vpop.f32.mrb[0].mxu0
    %v484 = vpop.f32.mrb[0].mxu0
    %v485 = vadd.f32 %v444, %v484
    %v486 = vpop.f32.mrb[0].mxu0
    %487 = vdwg.mxu0
    %488 = vst [vmem:[#allocation7] sm:$0xff] %v482
    %489 = vst [vmem:[#allocation7 + $0x8] sm:$0xff] %v485
    // Predicated region
    $region18: #{tpu_custom_call.1} parent=1 // pred_check
      _
    $region19: #{tpu_custom_call.1} parent=1 // pred_check_branch
      %491 = sbr.rel (0) target = $region21
    $region20: #{tpu_custom_call.1} parent=1 // pred_region
      %s493 = ssub.s32 256, 256
      %494 = vsyncadd [#allocation4], %s493
      %s495 = sshll.u32 [#allocation7], 4
      %s496 = int_to_ptr.vmem [resolvable:$true] %s495
      %501 = dma.vmem_to_hbm [thread:$0]  %s496, 256, %s2, [#allocation4], 128, 128, 8
    $region21: #{tpu_custom_call.1} parent=1 // pred_fallthru
      _
    // Predicated region
    $region22: #{tpu_custom_call.1} parent=1 // pred_check
      _
    $region23: #{tpu_custom_call.1} parent=1 // pred_check_branch
      %503 = sbr.rel (0) target = $region25
    $region24: #{tpu_custom_call.1} parent=1 // pred_region
      %504 = dma.done [#allocation4], 256
    $region25: #{tpu_custom_call.1} parent=1 // pred_fallthru
      _
    %505 = vsyncpa [#allocation3], 1
    %506 = vsyncpa [#allocation6], 1
    %507 = vsyncpa [#allocation4], 1

</llo_original>
